<compile_context>
chip_gen: v7x
topology: tpu7x:2x2x1
jax: 0.10.0
libtpu: 0.0.40
codegen_flags: <defaults>
</compile_context>

<pallas_src>
import functools

import jax
import jax.numpy as jnp
from jax import lax
from jax.experimental import pallas as pl
from jax.experimental.pallas import tpu as pltpu


def _var_full_batch_kernel(x_ref, var_ref, *, inv_b, inv_bm1):
    # x_ref: (B, TD) tile -- the whole batch (reduction axis) is resident.
    x = x_ref[...].astype(jnp.float32)
    mean = jnp.sum(x, axis=0, keepdims=True) * inv_b            # (1, TD)
    diff = x - mean
    var_ref[...] = jnp.sum(diff * diff, axis=0, keepdims=True) * inv_bm1


def _var_batch_chunked_kernel(x_ref, var_ref, mean_sc, m2_sc, *,
                              batch, bb, inv_bm1, needs_row_mask):
    # grid = (feature blocks ["parallel"], batch chunks ["arbitrary", innermost])
    bi = pl.program_id(1)
    nb = pl.num_programs(1)

    @pl.when(bi == 0)
    def _():
        mean_sc[...] = jnp.zeros_like(mean_sc)
        m2_sc[...] = jnp.zeros_like(m2_sc)

    x = x_ref[...].astype(jnp.float32)                           # (bb, TD)
    if needs_row_mask:
        n_c = jnp.minimum(bb, batch - bi * bb)                   # valid rows
        row = lax.broadcasted_iota(jnp.int32, x.shape, 0)
        valid = row < n_c
        x = jnp.where(valid, x, 0.0)
        n_c_f = n_c.astype(jnp.float32)
        inv_nc = 1.0 / n_c_f
    else:
        valid = None
        n_c_f = jnp.float32(bb)
        inv_nc = jnp.float32(1.0 / bb)                           # static fold

    chunk_sum = jnp.sum(x, axis=0, keepdims=True)                # (1, TD)
    chunk_mean = chunk_sum * inv_nc
    diff = x - chunk_mean
    if needs_row_mask:
        diff = jnp.where(valid, diff, 0.0)
    chunk_m2 = jnp.sum(diff * diff, axis=0, keepdims=True)       # (1, TD)

    # Chan et al. parallel-variance combine (stable across many chunks).
    n_old = (bi * bb).astype(jnp.float32)     # all previous chunks are full
    n_new = n_old + n_c_f
    delta = chunk_mean - mean_sc[...]
    mean_sc[...] = mean_sc[...] + delta * (n_c_f / n_new)
    m2_sc[...] = m2_sc[...] + chunk_m2 + (delta * delta) * (n_old * n_c_f / n_new)

    @pl.when(bi == nb - 1)
    def _():
        var_ref[...] = m2_sc[...] * inv_bm1


def divergence_loss(embeddings, batch_block=None):
    """Pallas TPU equivalent of torch.var(embeddings, dim=0).mean() (scalar f32).

    batch_block: optional override of the batch chunk size (rows per block);
    used to force / test the chunked-batch (Chan combine) path on small inputs.
    """
    B, D = embeddings.shape
    in_itemsize = jnp.dtype(embeddings.dtype).itemsize

    # ---- generation-aware VMEM limit (v7x: 64 MiB/TC; v5e/v6e: 128 MiB) -----
    try:
        vmem_cap = int(pltpu.get_tpu_info().vmem_capacity_bytes)
    except Exception:
        vmem_cap = 64 * 1024 * 1024          # conservative fallback (v7x size)
    vmem_limit = int(min(max(32 * 1024 * 1024, (vmem_cap * 3) // 5),
                         48 * 1024 * 1024))

    # ---- byte-budgeted block sizing ------------------------------------------
    # Live VMEM per block element: double-buffered input + up to ~5 live f32
    # temporaries inside the kernel (upcast, masked copy, diff, square, ...).
    # Leave headroom for the (1, TD) output double-buffer and scratch.
    per_elem_bytes = 2 * in_itemsize + 5 * 4
    block_budget = vmem_limit - 6 * 1024 * 1024
    max_block_elems = max(8 * 128, block_budget // per_elem_bytes)

    d128 = -(-D // 128)                       # feature extent in 128-lane groups

    # Batch rows per block: whole batch if a 128-wide full-batch slab fits the
    # budget, otherwise chunk the batch axis (reduction) across the grid.
    if batch_block is not None:
        BB = max(8, ((batch_block + 7) // 8) * 8)
        BB = min(BB, ((B + 7) // 8) * 8)
    elif (max_block_elems // max(B, 1)) >= 128:
        BB = B
    else:
        BB = max(8, ((max_block_elems // 128) // 8) * 8)
    chunked = BB < B
    if not chunked:
        BB = B
    nb = -(-B // BB) if chunked else 1

    # Feature columns per block: as many 128-lane groups as the byte budget
    # allows, but at least two feature-grid steps when D >= 256 so both v7x
    # TensorCores stream HBM.  When D < 128, use the exact extent (no padding).
    TD = max(128, min(((max_block_elems // BB) // 128) * 128, d128 * 128))
    if d128 >= 2:
        TD = min(TD, max(128, (d128 // 2) * 128))
    if D < 128:
        TD = D
    n_feat = -(-D // TD)

    # Tiny per-step DMAs: keep more copies in flight.
    triple_buffer = (BB * TD * in_itemsize < (1 << 20)) and (n_feat * nb >= 3)

    inv_bm1 = (1.0 / (B - 1)) if B > 1 else float("nan")   # torch: NaN at B==1

    if not chunked:
        kernel = functools.partial(_var_full_batch_kernel,
                                   inv_b=1.0 / B, inv_bm1=inv_bm1)
        grid = (n_feat,)
        in_index = lambda j: (0, j)
        out_index = lambda j: (0, j)
        scratch_shapes = ()
        dims = ("parallel",)
    else:
        kernel = functools.partial(_var_batch_chunked_kernel,
                                   batch=B, bb=BB, inv_bm1=inv_bm1,
                                   needs_row_mask=(B % BB != 0))
        grid = (n_feat, nb)                  # reduction (batch) axis innermost
        in_index = lambda j, bi: (bi, j)
        out_index = lambda j, bi: (0, j)
        scratch_shapes = (pltpu.VMEM((1, TD), jnp.float32),
                          pltpu.VMEM((1, TD), jnp.float32))
        dims = ("parallel", "arbitrary")

    if triple_buffer:
        in_spec = pl.BlockSpec((BB, TD), in_index, pipeline_mode=pl.Buffered(3))
    else:
        in_spec = pl.BlockSpec((BB, TD), in_index)

    var = pl.pallas_call(
        kernel,
        out_shape=jax.ShapeDtypeStruct((1, D), jnp.float32),
        grid_spec=pltpu.PrefetchScalarGridSpec(
            num_scalar_prefetch=0,
            grid=grid,
            in_specs=[in_spec],
            out_specs=pl.BlockSpec((1, TD), out_index),
            scratch_shapes=scratch_shapes,
        ),
        compiler_params=pltpu.CompilerParams(
            dimension_semantics=dims,
            vmem_limit_bytes=vmem_limit,
        ),
    )(embeddings)

    # Final mean over the feature columns; 1/D folds statically.
    return jnp.sum(var[0, :]) * (1.0 / D)


def _reference(embeddings):
    # Pure-JAX reference matching torch.var(dim=0, unbiased=True).mean()
    x = embeddings.astype(jnp.float32)
    return jnp.mean(jnp.var(x, axis=0, ddof=1))


if __name__ == "__main__":
    # Small demo shape: batch=8, hidden=32 (single feature tile, TD == D).
    key = jax.random.PRNGKey(0)
    B, D = 8, 32
    embeddings = jax.random.normal(key, (B, D), dtype=jnp.float32)
    loss = jax.block_until_ready(divergence_loss(embeddings))
    ref = jax.block_until_ready(_reference(embeddings))
    assert jnp.allclose(loss, ref, rtol=1e-5, atol=1e-6), (loss, ref)

    # Multi-tile feature grid with a ragged last tile (exercises >=2 "parallel"
    # feature steps and the small-block triple-buffer path).
    emb2 = jax.random.normal(jax.random.PRNGKey(1), (64, 640), dtype=jnp.float32)
    loss2 = jax.block_until_ready(divergence_loss(emb2))
    ref2 = jax.block_until_ready(_reference(emb2))
    assert jnp.allclose(loss2, ref2, rtol=1e-5, atol=1e-6), (loss2, ref2)

    # Chunked-batch path (Chan combine) with a ragged last batch chunk and a
    # ragged last feature tile, forced via a small batch_block.
    emb3 = jax.random.normal(jax.random.PRNGKey(2), (40, 160), dtype=jnp.float32)
    loss3 = jax.block_until_ready(divergence_loss(emb3, batch_block=16))
    ref3 = jax.block_until_ready(_reference(emb3))
    assert jnp.allclose(loss3, ref3, rtol=1e-5, atol=1e-6), (loss3, ref3)

    print("KERNEL_OK")
</pallas_src>

<mosaic_0001>
module attributes {stable_mosaic.version = 11 : i64} {
  func.func @_var_full_batch_kernel(%arg0: i32, %arg1: memref<8x32xf32, #tpu.memory_space<vmem>>, %arg2: memref<1x32xf32, #tpu.memory_space<vmem>>) attributes {dimension_semantics = [#tpu.dimension_semantics<parallel>], iteration_bounds = array<i64: 1>, scalar_prefetch = 0 : i64, scratch_operands = 0 : i64, tpu.core_type = #tpu.core_type<tc>, window_params = [{transform_indices = @transform_0, window_bounds = array<i64: 8, 32>}, {transform_indices = @transform_1, window_bounds = array<i64: 1, 32>}]} {
    %c0 = arith.constant 0 : index
    %c0_0 = arith.constant 0 : index
    %0 = vector.load %arg1[%c0, %c0_0] : memref<8x32xf32, #tpu.memory_space<vmem>>, vector<8x32xf32>
    %cst = arith.constant dense<0.000000e+00> : vector<32xf32>
    %1 = vector.multi_reduction <add>, %0, %cst [0] : vector<8x32xf32> to vector<32xf32>
    %2 = vector.shape_cast %1 : vector<32xf32> to vector<1x32xf32>
    %cst_1 = arith.constant 1.250000e-01 : f32
    %3 = vector.broadcast %cst_1 : f32 to vector<1x32xf32>
    %4 = arith.mulf %2, %3 : vector<1x32xf32>
    %5 = vector.broadcast %4 : vector<1x32xf32> to vector<8x32xf32>
    %6 = arith.subf %0, %5 : vector<8x32xf32>
    %7 = arith.mulf %6, %6 : vector<8x32xf32>
    %cst_2 = arith.constant dense<0.000000e+00> : vector<32xf32>
    %8 = vector.multi_reduction <add>, %7, %cst_2 [0] : vector<8x32xf32> to vector<32xf32>
    %9 = vector.shape_cast %8 : vector<32xf32> to vector<1x32xf32>
    %cst_3 = arith.constant 0.142857149 : f32
    %10 = vector.broadcast %cst_3 : f32 to vector<1x32xf32>
    %11 = arith.mulf %9, %10 : vector<1x32xf32>
    %c0_4 = arith.constant 0 : index
    %c0_5 = arith.constant 0 : index
    %12 = vector.load %arg2[%c0_4, %c0_5] : memref<1x32xf32, #tpu.memory_space<vmem>>, vector<1x32xf32>
    tpu.vector_store %arg2[%c0_4, %c0_5], %11 {strides = array<i32>} : memref<1x32xf32, #tpu.memory_space<vmem>>, vector<1x32xf32>,
    return
  }
  func.func @transform_0(%arg0: i32) -> (i32, i32) {
    %c0_i32 = arith.constant 0 : i32
    %c0_i32_0 = arith.constant 0 : i32
    return %c0_i32, %arg0 : i32, i32
  }
  func.func @transform_1(%arg0: i32) -> (i32, i32) {
    %c0_i32 = arith.constant 0 : i32
    %c0_i32_0 = arith.constant 0 : i32
    return %c0_i32, %arg0 : i32, i32
  }
}

</mosaic_0001>

<llo_original>
// kernel: tpu_custom_call.1
$region0: #{tpu_custom_call.1}
  #allocation0 [shape = 'u32[]', space=smem, size = 0x4, offset = 0x4, fixed_abs, tag = 'smem constant byte address 0x4 - core index']
  #allocation1 [shape = 'u32[144,128]{1,0:T(1,128)}', space=vmem, size = 0x12000, scoped, tag = 'internal scratch']
  %s0 = inlined_call_operand.hbm [shape: f32[8,32], index: 0, kind: input, shape index: {}]
  %s1 = inlined_call_operand.hbm [shape: f32[1,32], index: 1, kind: output, shape index: {}]
  %s2 = sld [smem:[#allocation0]]
  $region18: #{tpu_custom_call.1} parent=0
    _
  %s4 = ssub.s32 1, %s2
  %s5 = scalar_select 0, %s4, %s2
  $region1: #{tpu_custom_call.1} parent=0
    #allocation2 [shape = 'u8[4096]{0}', space=vmem, size = 0x1000, scoped, tag = 'input window, operand 0, single buffered']
    #allocation3 [shape = 's32[1]{0}', space=sflag, size = 0x4, scoped, tag = 'scoped memory for tpu_custom_call.1']
    #allocation4 [shape = 's32[1]{0}', space=sflag, size = 0x4, scoped, tag = 'scoped memory for tpu_custom_call.1']
    #allocation5 [shape = 'u8[512]{0}', space=vmem, size = 0x400, scoped, tag = 'output window, operand 0, single buffered']
    %6 = vsyncpa [#allocation3], 0
    %7 = vsyncpa [#allocation4], 0
    // Predicated region
    $region2: #{tpu_custom_call.1} parent=1 // pred_check
      _
    $region3: #{tpu_custom_call.1} parent=1 // pred_check_branch
      %9 = sbr.rel (0) target = $region5
    $region4: #{tpu_custom_call.1} parent=1 // pred_region
      %s11 = ssub.s32 128, 128
      %12 = vsyncadd [#allocation3], %s11
      %s14 = sshll.u32 [#allocation2], 4
      %s15 = int_to_ptr.vmem [resolvable:$true] %s14
      %17 = dma.hbm_to_vmem [thread:$0]  %s0, 128, %s15, [#allocation3]
    $region5: #{tpu_custom_call.1} parent=1 // pred_fallthru
      _
    // Predicated region
    $region6: #{tpu_custom_call.1} parent=1 // pred_check
      _
    $region7: #{tpu_custom_call.1} parent=1 // pred_check_branch
      %19 = sbr.rel (0) target = $region9
    $region8: #{tpu_custom_call.1} parent=1 // pred_region
      %20 = dma.done [#allocation3], 128
    $region9: #{tpu_custom_call.1} parent=1 // pred_fallthru
      _
    %v21 = vld [vmem:[#allocation2] sm:$0xff]
    %vm22 = vcmask 261120
    %v23 = vsel %vm22, %v21, 0.0
    %v24 = vrot.slane %v23, 4
    %v25 = vadd.f32 %v23, %v24
    %v26 = vrot.slane %v25, 2
    %v27 = vadd.f32 %v25, %v26
    %v28 = vrot.slane %v27, 1
    %v29 = vadd.f32 %v27, %v28
    %v30 = vmul.f32 %v29, 0.125
    %v31 = vsub.f32 %v21, %v30
    %v32 = vmul.f32 %v31, %v31
    %v33 = vsel %vm22, %v32, 0.0
    %v34 = vrot.slane %v33, 4
    %v35 = vadd.f32 %v33, %v34
    %v36 = vrot.slane %v35, 2
    %v37 = vadd.f32 %v35, %v36
    %v38 = vrot.slane %v37, 1
    %v39 = vadd.f32 %v37, %v38
    %v40 = vmul.f32 %v39, 0.14285715
    %vm41 = vcmask 253952
    %42 = vst.msk [vmem:[#allocation5] sm:$0x1] %vm41, %v40
    // Predicated region
    $region10: #{tpu_custom_call.1} parent=1 // pred_check
      _
    $region11: #{tpu_custom_call.1} parent=1 // pred_check_branch
      %44 = sbr.rel (0) target = $region13
    $region12: #{tpu_custom_call.1} parent=1 // pred_region
      %s46 = ssub.s32 16, 16
      %47 = vsyncadd [#allocation4], %s46
      %s49 = sshll.u32 [#allocation5], 4
      %s50 = int_to_ptr.vmem [resolvable:$true] %s49
      %52 = dma.vmem_to_hbm [thread:$0]  %s50, 16, %s1, [#allocation4]
    $region13: #{tpu_custom_call.1} parent=1 // pred_fallthru
      _
    // Predicated region
    $region14: #{tpu_custom_call.1} parent=1 // pred_check
      _
    $region15: #{tpu_custom_call.1} parent=1 // pred_check_branch
      %54 = sbr.rel (0) target = $region17
    $region16: #{tpu_custom_call.1} parent=1 // pred_region
      %55 = dma.done [#allocation4], 16
    $region17: #{tpu_custom_call.1} parent=1 // pred_fallthru
      _
    %56 = vsyncpa [#allocation3], 1
    %57 = vsyncpa [#allocation4], 1

</llo_original>
